<compile_context>
chip_gen: v6e
topology: v6e:2x2x1
jax: 0.10.0
libtpu: 0.0.40
codegen_flags: <defaults>
</compile_context>

<pallas_src>
import functools

import jax
import jax.numpy as jnp
from jax import lax
from jax.experimental import pallas as pl
from jax.experimental.pallas import tpu as pltpu


_MiB = 1 << 20
_TARGET_TILE_F32_BYTES = 4 * _MiB      # per-step f32 compute tile target
_WORKING_SET_BUDGET = 24 * _MiB        # pipelined VMEM working-set budget
_VMEM_LIMIT_FLOOR = 32 * _MiB
_VMEM_LIMIT_CAP = 48 * _MiB            # stays under v7x's 64 MiB physical VMEM


def _sublane(itemsize: int) -> int:
    """Packed sublane tile height: f32 -> 8, bf16 -> 16, int8/fp8 -> 32."""
    return max(8, 32 // max(1, itemsize))


def _per_elem_footprint(itemsize: int) -> int:
    """Pipelined VMEM bytes per tile element: 2x in + 2x out double buffers
    plus ~3 f32-wide elementwise temporaries."""
    return 4 * itemsize + 12


def _vmem_limit(working_set_bytes: int) -> int:
    return int(min(_VMEM_LIMIT_CAP,
                   max(_VMEM_LIMIT_FLOOR, working_set_bytes + 12 * _MiB)))


# --------------------------------------------------------------------------- #
# Shared per-row attention math (f32 in / f32 out).
# --------------------------------------------------------------------------- #
def _attend(x, sum_x, sum_x2, hw: int, e_lambda: float):
    """x: (R, C) f32 tile; sum_x/sum_x2: (R, 1) f32 per-row stats over full H*W."""
    mu = sum_x * (1.0 / float(hw))                        # per-row mean
    # Single-pass variance; clamp to kill catastrophic-cancellation negatives.
    s = jnp.maximum(sum_x2 - sum_x * mu, 0.0)
    d = (x - mu) ** 2
    # n = h*w - 1 as in PyTorch; hw == 1 -> inf/NaN, same as the reference.
    inv_n = jnp.float32(1.0) / jnp.float32(hw - 1)
    base = s * inv_n + e_lambda                            # (R, 1), > 0
    r = pl.reciprocal(base, approx=True)                   # EUP slot (free)
    r = r * (2.0 - base * r)                               # one Newton step
    y = d * (0.25 * r) + 0.5                               # 4*(...) folded in
    return x * jax.nn.sigmoid(y)


# --------------------------------------------------------------------------- #
# Fused single-pass kernel: whole H*W row(s) resident per grid step.
# --------------------------------------------------------------------------- #
def _simam_fused_kernel(x_ref, o_ref, *, e_lambda: float):
    x = x_ref[...].astype(jnp.float32)                     # (TC, HW), cast once
    hw = x.shape[-1]
    sum_x = jnp.sum(x, axis=-1, keepdims=True)
    sum_x2 = jnp.sum(x * x, axis=-1, keepdims=True)
    o_ref[...] = _attend(x, sum_x, sum_x2, hw, e_lambda).astype(o_ref.dtype)


def _simam_fused(x2: jax.Array, e_lambda: float, tc: int) -> jax.Array:
    num_rows, hw = x2.shape
    working = tc * hw * _per_elem_footprint(x2.dtype.itemsize)
    size = num_rows * hw
    cost = pl.CostEstimate(
        flops=12 * size,
        transcendentals=size,                              # sigmoid -> exp/elem
        bytes_accessed=2 * size * x2.dtype.itemsize,
    )
    return pl.pallas_call(
        functools.partial(_simam_fused_kernel, e_lambda=float(e_lambda)),
        out_shape=jax.ShapeDtypeStruct((num_rows, hw), x2.dtype),
        grid_spec=pltpu.PrefetchScalarGridSpec(
            num_scalar_prefetch=0,
            grid=(pl.cdiv(num_rows, tc),),
            in_specs=[pl.BlockSpec((tc, hw), lambda i: (i, 0))],
            out_specs=pl.BlockSpec((tc, hw), lambda i: (i, 0)),
        ),
        compiler_params=pltpu.CompilerParams(
            dimension_semantics=("parallel",),
            vmem_limit_bytes=_vmem_limit(working),
        ),
        cost_estimate=cost,
    )(x2)


# --------------------------------------------------------------------------- #
# Huge-H*W path: stats-accumulate pass + elementwise apply pass.
# --------------------------------------------------------------------------- #
def _simam_stats_kernel(x_ref, sx_ref, sx2_ref, *, hw: int, tw: int):
    j = pl.program_id(1)

    @pl.when(j == 0)
    def _():
        sx_ref[...] = jnp.zeros_like(sx_ref)
        sx2_ref[...] = jnp.zeros_like(sx2_ref)

    x = x_ref[...].astype(jnp.float32)                     # (TC, TW)
    if hw % tw != 0:
        # Mask the out-of-range tail of the last (partial) column block.
        col = j * tw + lax.broadcasted_iota(jnp.int32, x.shape, 1)
        x = jnp.where(col < hw, x, 0.0)
    sx_ref[...] += jnp.sum(x, axis=-1, keepdims=True)
    sx2_ref[...] += jnp.sum(x * x, axis=-1, keepdims=True)


def _simam_apply_kernel(x_ref, sx_ref, sx2_ref, o_ref, *, e_lambda: float, hw: int):
    x = x_ref[...].astype(jnp.float32)
    o_ref[...] = _attend(x, sx_ref[...], sx2_ref[...], hw, e_lambda).astype(o_ref.dtype)


def _simam_split(x2: jax.Array, e_lambda: float, tc: int, tw: int) -> jax.Array:
    num_rows, hw = x2.shape
    itemsize = x2.dtype.itemsize
    n_row = pl.cdiv(num_rows, tc)
    n_col = pl.cdiv(hw, tw)
    size = num_rows * hw
    working = tc * tw * _per_elem_footprint(itemsize)

    # Pass 1: per-row sum(x) and sum(x*x), accumulated across column chunks.
    sum_x, sum_x2 = pl.pallas_call(
        functools.partial(_simam_stats_kernel, hw=hw, tw=tw),
        out_shape=(jax.ShapeDtypeStruct((num_rows, 1), jnp.float32),
                   jax.ShapeDtypeStruct((num_rows, 1), jnp.float32)),
        grid_spec=pltpu.PrefetchScalarGridSpec(
            num_scalar_prefetch=0,
            grid=(n_row, n_col),
            in_specs=[pl.BlockSpec((tc, tw), lambda i, j: (i, j))],
            out_specs=[pl.BlockSpec((tc, 1), lambda i, j: (i, 0)),
                       pl.BlockSpec((tc, 1), lambda i, j: (i, 0))],
        ),
        compiler_params=pltpu.CompilerParams(
            dimension_semantics=("parallel", "arbitrary"),
            vmem_limit_bytes=_vmem_limit(working),
        ),
        cost_estimate=pl.CostEstimate(
            flops=3 * size, transcendentals=0,
            bytes_accessed=size * itemsize),
    )(x2)

    # Pass 2: elementwise attention apply (fully parallel grid).
    out2 = pl.pallas_call(
        functools.partial(_simam_apply_kernel, e_lambda=float(e_lambda), hw=hw),
        out_shape=jax.ShapeDtypeStruct((num_rows, hw), x2.dtype),
        grid_spec=pltpu.PrefetchScalarGridSpec(
            num_scalar_prefetch=0,
            grid=(n_row, n_col),
            in_specs=[pl.BlockSpec((tc, tw), lambda i, j: (i, j)),
                      pl.BlockSpec((tc, 1), lambda i, j: (i, 0)),
                      pl.BlockSpec((tc, 1), lambda i, j: (i, 0))],
            out_specs=pl.BlockSpec((tc, tw), lambda i, j: (i, j)),
        ),
        compiler_params=pltpu.CompilerParams(
            dimension_semantics=("parallel", "parallel"),
            vmem_limit_bytes=_vmem_limit(working),
        ),
        cost_estimate=pl.CostEstimate(
            flops=10 * size, transcendentals=size,
            bytes_accessed=2 * size * itemsize),
    )(x2, sum_x, sum_x2)
    return out2


# --------------------------------------------------------------------------- #
# Public wrapper.
# --------------------------------------------------------------------------- #
def simam(x: jax.Array, e_lambda: float = 1e-4) -> jax.Array:
    """SimAM: x * sigmoid(y), y from per-(b, c) spatial statistics (NCHW)."""
    b, c, h, w = x.shape
    num_rows, hw = b * c, h * w
    x2 = x.reshape(num_rows, hw)                            # lane axis = H*W

    itemsize = x.dtype.itemsize
    sublane = _sublane(itemsize)
    min_tc = num_rows if num_rows < sublane else sublane
    per_elem = _per_elem_footprint(itemsize)

    # Can a minimal-height block holding full rows fit the VMEM working set?
    if min_tc * hw * per_elem <= _WORKING_SET_BUDGET or hw <= 128:
        # ----- fused single-pass path (common case) -----
        tc = max(1, (_TARGET_TILE_F32_BYTES // 4) // hw)    # ~4 MiB f32 tile
        tc = min(tc, max(min_tc, _WORKING_SET_BUDGET // (hw * per_elem)))
        if tc < num_rows:
            tc = min(tc, pl.cdiv(num_rows, 2))              # >= 2 steps (megacore)
            tc = max(sublane, (tc // sublane) * sublane)    # packed-sublane align
        tc = min(tc, num_rows)
        out2 = _simam_fused(x2, e_lambda, tc)
    else:
        # ----- huge-H*W path: accumulate stats, then apply -----
        tc = min_tc
        tw = (_TARGET_TILE_F32_BYTES // 4) // tc
        tw = min(tw, _WORKING_SET_BUDGET // (tc * per_elem))
        tw = max(128, (tw // 128) * 128)                    # lane-aligned chunk
        tw = min(tw, hw)
        out2 = _simam_split(x2, e_lambda, tc, tw)

    return out2.reshape(b, c, h, w)


# --------------------------------------------------------------------------- #
# Pure-JAX reference matching the PyTorch forward exactly.
# --------------------------------------------------------------------------- #
def _simam_ref(x: jax.Array, e_lambda: float = 1e-4) -> jax.Array:
    b, c, h, w = x.shape
    n = w * h - 1
    xf = x.astype(jnp.float32)
    mu = jnp.mean(xf, axis=(2, 3), keepdims=True)
    d = (xf - mu) ** 2
    s = jnp.sum(d, axis=(2, 3), keepdims=True)
    y = d / (4.0 * (s / n + e_lambda)) + 0.5
    return (xf * jax.nn.sigmoid(y)).astype(x.dtype)


if __name__ == "__main__":
    # Small NCHW input (exercises the fused single-pass path).
    B, C, H, W = 2, 4, 16, 16
    x_small = jax.random.normal(jax.random.PRNGKey(0), (B, C, H, W),
                                dtype=jnp.float32)
    out_small = jax.block_until_ready(simam(x_small))
    ref_small = _simam_ref(x_small)
    assert out_small.shape == (B, C, H, W)
    assert jnp.allclose(out_small, ref_small, atol=2e-4, rtol=2e-4), \
        "fused path mismatch vs reference"

    # Large spatial map (exercises the stats-accumulate + apply split path:
    # a single 8-row x (512*512) f32 block would blow the VMEM budget).
    x_big = jax.random.normal(jax.random.PRNGKey(1), (1, 8, 512, 512),
                              dtype=jnp.float32)
    out_big = jax.block_until_ready(simam(x_big))
    ref_big = _simam_ref(x_big)
    assert out_big.shape == x_big.shape
    assert jnp.allclose(out_big, ref_big, atol=1e-3, rtol=1e-3), \
        "split path mismatch vs reference"

    print("KERNEL_OK")
</pallas_src>

<mosaic_0001>
module attributes {stable_mosaic.version = 11 : i64} {
  func.func @_simam_fused_kernel(%arg0: i32, %arg1: memref<8x256xf32, #tpu.memory_space<vmem>>, %arg2: memref<8x256xf32, #tpu.memory_space<vmem>>) attributes {dimension_semantics = [#tpu.dimension_semantics<parallel>], iteration_bounds = array<i64: 1>, scalar_prefetch = 0 : i64, scratch_operands = 0 : i64, tpu.core_type = #tpu.core_type<tc>, window_params = [{transform_indices = @transform_0, window_bounds = array<i64: 8, 256>}, {transform_indices = @transform_1, window_bounds = array<i64: 8, 256>}]} {
    %c0 = arith.constant 0 : index
    %c0_0 = arith.constant 0 : index
    %0 = vector.load %arg1[%c0, %c0_0] : memref<8x256xf32, #tpu.memory_space<vmem>>, vector<8x256xf32>
    %cst = arith.constant dense<0.000000e+00> : vector<8xf32>
    %1 = vector.multi_reduction <add>, %0, %cst [1] : vector<8x256xf32> to vector<8xf32>
    %2 = vector.shape_cast %1 : vector<8xf32> to vector<8x1xf32>
    %3 = arith.mulf %0, %0 : vector<8x256xf32>
    %cst_1 = arith.constant dense<0.000000e+00> : vector<8xf32>
    %4 = vector.multi_reduction <add>, %3, %cst_1 [1] : vector<8x256xf32> to vector<8xf32>
    %5 = vector.shape_cast %4 : vector<8xf32> to vector<8x1xf32>
    %cst_2 = arith.constant 3.906250e-03 : f32
    %6 = vector.broadcast %cst_2 : f32 to vector<8x1xf32>
    %7 = arith.mulf %2, %6 : vector<8x1xf32>
    %8 = arith.mulf %2, %7 : vector<8x1xf32>
    %9 = arith.subf %5, %8 : vector<8x1xf32>
    %cst_3 = arith.constant 0.000000e+00 : f32
    %10 = vector.broadcast %cst_3 : f32 to vector<8x1xf32>
    %11 = arith.maximumf %9, %10 : vector<8x1xf32>
    %12 = vector.broadcast %7 : vector<8x1xf32> to vector<8x256xf32>
    %13 = arith.subf %0, %12 : vector<8x256xf32>
    %14 = arith.mulf %13, %13 : vector<8x256xf32>
    %cst_4 = arith.constant 1.000000e+00 : f32
    %cst_5 = arith.constant 2.550000e+02 : f32
    %15 = arith.divf %cst_4, %cst_5 : f32
    %16 = vector.broadcast %15 : f32 to vector<8x1xf32>
    %17 = arith.mulf %11, %16 : vector<8x1xf32>
    %cst_6 = arith.constant 9.99999974E-5 : f32
    %18 = vector.broadcast %cst_6 : f32 to vector<8x1xf32>
    %19 = arith.addf %17, %18 : vector<8x1xf32>
    %20 = tpu.reciprocal %19 {approx = true} : vector<8x1xf32> -> vector<8x1xf32>
    %21 = arith.mulf %19, %20 : vector<8x1xf32>
    %cst_7 = arith.constant 2.000000e+00 : f32
    %22 = vector.broadcast %cst_7 : f32 to vector<8x1xf32>
    %23 = arith.subf %22, %21 : vector<8x1xf32>
    %24 = arith.mulf %20, %23 : vector<8x1xf32>
    %cst_8 = arith.constant 2.500000e-01 : f32
    %25 = vector.broadcast %cst_8 : f32 to vector<8x1xf32>
    %26 = arith.mulf %25, %24 : vector<8x1xf32>
    %27 = vector.broadcast %26 : vector<8x1xf32> to vector<8x256xf32>
    %28 = arith.mulf %14, %27 : vector<8x256xf32>
    %cst_9 = arith.constant 5.000000e-01 : f32
    %29 = vector.broadcast %cst_9 : f32 to vector<8x256xf32>
    %30 = arith.addf %28, %29 : vector<8x256xf32>
    %31 = arith.negf %30 : vector<8x256xf32>
    %32 = math.exp %31 : vector<8x256xf32>
    %cst_10 = arith.constant 1.000000e+00 : f32
    %33 = vector.broadcast %cst_10 : f32 to vector<8x256xf32>
    %34 = arith.addf %33, %32 : vector<8x256xf32>
    %35 = arith.divf %33, %34 : vector<8x256xf32>
    %36 = arith.mulf %0, %35 : vector<8x256xf32>
    %c0_11 = arith.constant 0 : index
    %c0_12 = arith.constant 0 : index
    %37 = vector.load %arg2[%c0_11, %c0_12] : memref<8x256xf32, #tpu.memory_space<vmem>>, vector<8x256xf32>
    tpu.vector_store %arg2[%c0_11, %c0_12], %36 {strides = array<i32>} : memref<8x256xf32, #tpu.memory_space<vmem>>, vector<8x256xf32>,
    return
  }
  func.func @transform_0(%arg0: i32) -> (i32, i32) {
    %c0_i32 = arith.constant 0 : i32
    %c0_i32_0 = arith.constant 0 : i32
    return %arg0, %c0_i32 : i32, i32
  }
  func.func @transform_1(%arg0: i32) -> (i32, i32) {
    %c0_i32 = arith.constant 0 : i32
    %c0_i32_0 = arith.constant 0 : i32
    return %arg0, %c0_i32 : i32, i32
  }
}

</mosaic_0001>

<llo_original>
// kernel: tpu_custom_call.1
$region0: #{tpu_custom_call.1}
  #allocation0 [shape = 'u32[]', space=smem, size = 0x4, offset = 0x4, fixed_abs, tag = 'smem constant byte address 0x4 - core index']
  #allocation1 [shape = 'u32[144,128]{1,0:T(1,128)}', space=vmem, size = 0x12000, scoped, tag = 'internal scratch']
  %s0 = inlined_call_operand.hbm [shape: f32[8,256], index: 0, kind: input, shape index: {}]
  %s1 = inlined_call_operand.hbm [shape: f32[8,256], index: 1, kind: output, shape index: {}]
  %s2 = sld [smem:[#allocation0]]
  $region18: #{tpu_custom_call.1} parent=0
    _
  %s4 = ssub.s32 1, %s2
  %s5 = scalar_select 0, %s4, %s2
  $region1: #{tpu_custom_call.1} parent=0
    #allocation2 [shape = 'u8[8192]{0}', space=vmem, size = 0x2000, scoped, tag = 'input window, operand 0, single buffered']
    #allocation3 [shape = 's32[1]{0}', space=sflag, size = 0x4, scoped, tag = 'scoped memory for tpu_custom_call.1']
    #allocation4 [shape = 's32[1]{0}', space=sflag, size = 0x4, scoped, tag = 'scoped memory for tpu_custom_call.1']
    #allocation5 [shape = 'u8[8192]{0}', space=vmem, size = 0x2000, scoped, tag = 'output window, operand 0, single buffered']
    %6 = vsyncpa [#allocation3], 0
    %7 = vsyncpa [#allocation4], 0
    // Predicated region
    $region2: #{tpu_custom_call.1} parent=1 // pred_check
      _
    $region3: #{tpu_custom_call.1} parent=1 // pred_check_branch
      %9 = sbr.rel (0) target = $region5
    $region4: #{tpu_custom_call.1} parent=1 // pred_region
      %s11 = ssub.s32 256, 256
      %12 = vsyncadd [#allocation3], %s11
      %s14 = sshll.u32 [#allocation2], 4
      %s15 = int_to_ptr.vmem [resolvable:$true] %s14
      %17 = dma.hbm_to_vmem [thread:$0]  %s0, 256, %s15, [#allocation3]
    $region5: #{tpu_custom_call.1} parent=1 // pred_fallthru
      _
    // Predicated region
    $region6: #{tpu_custom_call.1} parent=1 // pred_check
      _
    $region7: #{tpu_custom_call.1} parent=1 // pred_check_branch
      %19 = sbr.rel (0) target = $region9
    $region8: #{tpu_custom_call.1} parent=1 // pred_region
      %20 = dma.done [#allocation3], 256
    $region9: #{tpu_custom_call.1} parent=1 // pred_fallthru
      _
    %v21 = vld [vmem:[#allocation2] sm:$0xff]
    %v22 = vld [vmem:[#allocation2 + $0x8] sm:$0xff]
    %v23 = vadd.f32 %v21, %v22
    %24 = vadd.xlane.f32.xlu0 %v23
    %v25 = vpop.xlane.xlu0 %24
    %v26 = vmul.f32 %v21, %v21
    %v27 = vmul.f32 %v22, %v22
    %v28 = vadd.f32 %v26, %v27
    %29 = vadd.xlane.f32.xlu0 %v28
    %v30 = vpop.xlane.xlu0 %29
    %v31 = vmul.f32 %v25, 0.00390625
    %v32 = vmul.f32 %v25, %v31
    %v33 = vsub.f32 %v30, %v32
    %v34 = vmax.f32 %v33, 0.0
    %v35 = vsub.f32 %v21, %v31
    %v36 = vsub.f32 %v22, %v31
    %v37 = vmul.f32 %v35, %v35
    %v38 = vmul.f32 %v36, %v36
    %v39 = vmul.f32 %v34, 0.003921569
    %v40 = vadd.f32 %v39, 0.0001
    %v41 = vrcp.pop %v40
    %v42 = vmul.f32 %v40, %v41
    %v43 = vsub.f32 2.0, %v42
    %v44 = vmul.f32 %v41, %v43
    %v45 = vmul.f32 %v44, 0.25
    %v46 = vmul.f32 %v37, %v45
    %v47 = vmul.f32 %v38, %v45
    %v48 = vadd.f32 %v46, 0.5
    %v49 = vadd.f32 %v47, 0.5
    %v50 = vxor.u32 %v48, 2147483648
    %v51 = vxor.u32 %v49, 2147483648
    %v52 = vmul.f32 %v50, 1.442695
    %v53 = vpow.pop %v52
    %v54 = vmul.f32 %v51, 1.442695
    %v55 = vpow.pop %v54
    %v56 = vadd.f32 %v53, 1.0
    %v57 = vadd.f32 %v55, 1.0
    %v58 = vrcp.pop %v56
    %v59 = vmul.f32 1.0, %v58
    %v60 = vrcp.pop %v57
    %v61 = vmul.f32 1.0, %v60
    %v62 = vmul.f32 %v21, %v59
    %v63 = vmul.f32 %v22, %v61
    %64 = vst [vmem:[#allocation5] sm:$0xff] %v62
    %65 = vst [vmem:[#allocation5 + $0x8] sm:$0xff] %v63
    // Predicated region
    $region10: #{tpu_custom_call.1} parent=1 // pred_check
      _
    $region11: #{tpu_custom_call.1} parent=1 // pred_check_branch
      %67 = sbr.rel (0) target = $region13
    $region12: #{tpu_custom_call.1} parent=1 // pred_region
      %s69 = ssub.s32 256, 256
      %70 = vsyncadd [#allocation4], %s69
      %s72 = sshll.u32 [#allocation5], 4
      %s73 = int_to_ptr.vmem [resolvable:$true] %s72
      %75 = dma.vmem_to_hbm [thread:$0]  %s73, 256, %s1, [#allocation4]
    $region13: #{tpu_custom_call.1} parent=1 // pred_fallthru
      _
    // Predicated region
    $region14: #{tpu_custom_call.1} parent=1 // pred_check
      _
    $region15: #{tpu_custom_call.1} parent=1 // pred_check_branch
      %77 = sbr.rel (0) target = $region17
    $region16: #{tpu_custom_call.1} parent=1 // pred_region
      %78 = dma.done [#allocation4], 256
    $region17: #{tpu_custom_call.1} parent=1 // pred_fallthru
      _
    %79 = vsyncpa [#allocation3], 1
    %80 = vsyncpa [#allocation4], 1

</llo_original>
